<compile_context>
chip_gen: v6e
topology: v6e:2x2x1
jax: 0.10.0
libtpu: 0.0.40
codegen_flags: <defaults>
</compile_context>

<pallas_src>
import functools

import jax
import jax.numpy as jnp
from jax.experimental import pallas as pl
from jax.experimental.pallas import tpu as pltpu


def _round_up(a, m):
    return ((a + m - 1) // m) * m


# ---------------------------------------------------------------------------
# Pass 1: Linear + ReLU, accumulate per-graph sum(h) and sum(h*h).
# Grid = (ncore, tiles_per_core); each core owns its own stats slab.
# ---------------------------------------------------------------------------
def _linear_stats_kernel(x_ref, w_ref, b_ref, batch_row_ref, stats_ref,
                         *, num_graphs, c_pad):
    i = pl.program_id(1)                              # tile index within this core

    @pl.when(i == 0)
    def _():
        stats_ref[...] = jnp.zeros_like(stats_ref)

    x = x_ref[...]                                    # [TN, Cin] f32 (streams)
    w = w_ref[...]                                    # [Cin, Cp] f32 (resident)
    b = b_ref[...]                                    # [1, Cp]   f32 (resident)

    h = jnp.maximum(jnp.dot(x, w, preferred_element_type=jnp.float32) + b, 0.0)

    tn = x.shape[0]
    batch_row = batch_row_ref[...]                    # [1, TN] int32 (pad rows = -1)
    gids = jax.lax.broadcasted_iota(jnp.int32, (num_graphs, tn), 0)
    onehot = (gids == batch_row).astype(jnp.float32)  # [G, TN] (VPU, no transpose)

    # Two MXU passes, contraction length TN; no concat temp, no in-kernel counts.
    stats_ref[:, :c_pad] += jnp.dot(onehot, h, preferred_element_type=jnp.float32)
    stats_ref[:, c_pad:] += jnp.dot(onehot, h * h, preferred_element_type=jnp.float32)


# ---------------------------------------------------------------------------
# Pass 2: recompute h = relu(x@W+b) and apply per-graph scale/shift.
# ---------------------------------------------------------------------------
def _normalize_kernel(x_ref, batch_col_ref, w_ref, b_ref, scale_ref, shift_ref,
                      out_ref, *, num_graphs):
    x = x_ref[...]                                    # [TN, Cin]
    h = jnp.maximum(
        jnp.dot(x, w_ref[...], preferred_element_type=jnp.float32) + b_ref[...],
        0.0)                                          # [TN, Cp]

    bcol = batch_col_ref[...]                         # [TN, 1] int32 (pad rows = -1)
    scale_g = scale_ref[...]                          # [G, Cp] (resident)
    shift_g = shift_ref[...]                          # [G, Cp] (resident)

    tn, cp = h.shape
    if num_graphs <= 4:
        # Tiny G: a handful of VALU selects; cheaper than a tiny-K MXU pass.
        scale_n = jnp.zeros((tn, cp), jnp.float32)
        shift_n = jnp.zeros((tn, cp), jnp.float32)
        for gi in range(num_graphs):
            m = (bcol == gi).astype(jnp.float32)              # [TN, 1]
            scale_n = scale_n + m * scale_g[gi:gi + 1, :]
            shift_n = shift_n + m * shift_g[gi:gi + 1, :]
    else:
        # MXU one-hot gather keeps the VPU free; pass stays DMA-bound.
        gids = jax.lax.broadcasted_iota(jnp.int32, (tn, num_graphs), 1)
        onehot = (bcol == gids).astype(jnp.float32)           # [TN, G]
        scale_n = jnp.dot(onehot, scale_g, preferred_element_type=jnp.float32)
        shift_n = jnp.dot(onehot, shift_g, preferred_element_type=jnp.float32)

    out_ref[...] = (h * scale_n + shift_n).astype(out_ref.dtype)


# ---------------------------------------------------------------------------
# Wrapper
# ---------------------------------------------------------------------------
def linear_module_forward(x, batch, w, b, gamma, beta, *, num_graphs, eps=1e-5):
    """x: [N, Cin] f32; batch: [N] int; w: [Cout, Cin]; b/gamma/beta: [Cout]."""
    n, c_in = x.shape
    c_out = w.shape[0]
    g = int(num_graphs)
    eps = float(eps)

    cp = _round_up(c_out, 128)                    # lane-dense padded channels
    tn = min(1024, _round_up(n, 128))             # big row tile: amortize step cost
    n_tiles = -(-n // tn)
    ncore = 2 if n_tiles >= 2 else 1              # per-core partial stats (v7x 2 TCs)
    tiles_per_core = -(-n_tiles // ncore)
    n_pad = ncore * tiles_per_core * tn
    n_tiles_total = ncore * tiles_per_core

    # Pad params (zeros in padded channels => padded lanes stay exactly 0).
    w_t = jnp.zeros((c_in, cp), jnp.float32).at[:, :c_out].set(
        jnp.transpose(w).astype(jnp.float32))
    b2 = jnp.zeros((1, cp), jnp.float32).at[:, :c_out].set(b)
    gamma2 = jnp.zeros((1, cp), jnp.float32).at[:, :c_out].set(gamma)
    beta2 = jnp.zeros((1, cp), jnp.float32).at[:, :c_out].set(beta)

    # Pad rows; padded rows get batch id -1 so they never enter any statistic.
    x_p = jnp.zeros((n_pad, c_in), jnp.float32).at[:n, :].set(x)
    batch_i32 = batch.astype(jnp.int32)
    batch_p = jnp.full((n_pad,), -1, jnp.int32).at[:n].set(batch_i32)
    batch_row = batch_p.reshape(1, n_pad)         # lane-major layout for pass 1
    batch_col = batch_p.reshape(n_pad, 1)         # sublane-major layout for pass 2

    # Per-graph counts computed once in plain XLA (not in the hot loop).
    counts = jax.ops.segment_sum(jnp.ones((n,), jnp.float32), batch_i32,
                                 num_segments=g)

    cparams_p1 = pltpu.CompilerParams(
        dimension_semantics=("parallel", "arbitrary"),  # cores x stats reduction
        vmem_limit_bytes=32 * 1024 * 1024,
    )
    cparams_p2 = pltpu.CompilerParams(
        dimension_semantics=("parallel",),              # shard tiles across TCs
        vmem_limit_bytes=32 * 1024 * 1024,
    )

    # ---- Pass 1: per-graph sum / sum-of-squares (per-core partial slabs) ----
    kernel1 = functools.partial(_linear_stats_kernel, num_graphs=g, c_pad=cp)
    stats = pl.pallas_call(
        kernel1,
        grid=(ncore, tiles_per_core),
        in_specs=[
            pl.BlockSpec((tn, c_in), lambda c, i: (c * tiles_per_core + i, 0)),
            pl.BlockSpec((c_in, cp), lambda c, i: (0, 0)),   # W resident
            pl.BlockSpec((1, cp), lambda c, i: (0, 0)),      # b resident
            pl.BlockSpec((1, tn), lambda c, i: (0, c * tiles_per_core + i)),
        ],
        out_specs=pl.BlockSpec((None, g, 2 * cp), lambda c, i: (c, 0, 0)),
        out_shape=jax.ShapeDtypeStruct((ncore, g, 2 * cp), jnp.float32),
        compiler_params=cparams_p1,
    )(x_p, w_t, b2, batch_row)

    # ---- Finalize per-graph stats (tiny [G, Cp] math in XLA, not hot) ----
    stats_sum = jnp.sum(stats, axis=0)                        # merge core slabs
    sum_h = stats_sum[:, :cp]
    sum_h2 = stats_sum[:, cp:]
    cnt = jnp.maximum(counts, 1.0)[:, None]                   # [G, 1]
    mean_g = sum_h / cnt
    var_g = jnp.maximum(sum_h2 / cnt - mean_g * mean_g, 0.0)  # clamp cancellation
    inv_std = jax.lax.rsqrt(var_g + eps)
    scale_g = gamma2 * inv_std                                # [G, Cp]
    shift_g = beta2 - mean_g * scale_g                        # [G, Cp]

    # ---- Pass 2: recompute h and normalize (no h round-trip through HBM) ----
    kernel2 = functools.partial(_normalize_kernel, num_graphs=g)
    out_p = pl.pallas_call(
        kernel2,
        grid=(n_tiles_total,),
        in_specs=[
            pl.BlockSpec((tn, c_in), lambda i: (i, 0)),       # x streams (again)
            pl.BlockSpec((tn, 1), lambda i: (i, 0)),          # batch col streams
            pl.BlockSpec((c_in, cp), lambda i: (0, 0)),       # W resident
            pl.BlockSpec((1, cp), lambda i: (0, 0)),          # b resident
            pl.BlockSpec((g, cp), lambda i: (0, 0)),          # scale resident
            pl.BlockSpec((g, cp), lambda i: (0, 0)),          # shift resident
        ],
        out_specs=pl.BlockSpec((tn, cp), lambda i: (i, 0)),
        out_shape=jax.ShapeDtypeStruct((n_pad, cp), jnp.float32),
        compiler_params=cparams_p2,
    )(x_p, batch_col, w_t, b2, scale_g, shift_g)

    # Slice kept only to honor the module's [N, Cout] return contract.
    return out_p[:n, :c_out], batch


# ---------------------------------------------------------------------------
# Pure-JAX reference (module semantics)
# ---------------------------------------------------------------------------
def _reference(x, batch, w, b, gamma, beta, num_graphs, eps=1e-5):
    h = jnp.maximum(x @ w.T + b, 0.0)
    seg = jax.nn.one_hot(batch, num_graphs, dtype=jnp.float32)    # [N, G]
    counts = jnp.maximum(seg.sum(0), 1.0)[:, None]                # [G, 1]
    mean_g = (seg.T @ h) / counts
    mean_n = seg @ mean_g
    d = h - mean_n
    var_g = (seg.T @ (d * d)) / counts
    var_n = seg @ var_g
    return d / jnp.sqrt(var_n + eps) * gamma + beta


if __name__ == "__main__":
    key = jax.random.PRNGKey(0)
    k_x, k_w, k_b = jax.random.split(key, 3)

    N = 16            # total nodes
    IN_CH = 8
    OUT_CH = 32
    NUM_GRAPHS = 2

    x = jax.random.normal(k_x, (N, IN_CH), dtype=jnp.float32)
    batch = jnp.array([0, 0, 1, 0, 1, 1, 0, 1, 0, 0, 1, 1, 0, 1, 0, 1],
                      dtype=jnp.int32)

    w = jax.random.normal(k_w, (OUT_CH, IN_CH), dtype=jnp.float32) * 0.1
    b = jax.random.normal(k_b, (OUT_CH,), dtype=jnp.float32) * 0.1
    gamma = jnp.ones((OUT_CH,), dtype=jnp.float32)   # PyTorch affine init
    beta = jnp.zeros((OUT_CH,), dtype=jnp.float32)

    out, batch_out = linear_module_forward(x, batch, w, b, gamma, beta,
                                           num_graphs=NUM_GRAPHS)
    out = jax.block_until_ready(out)

    ref = _reference(x, batch, w, b, gamma, beta, NUM_GRAPHS)
    assert out.shape == (N, OUT_CH)
    assert jnp.allclose(out, ref, atol=1e-4, rtol=1e-4), "mismatch vs reference"
    print("KERNEL_OK")
</pallas_src>

<mosaic_0001>
module attributes {stable_mosaic.version = 11 : i64} {
  func.func @_linear_stats_kernel(%arg0: i32, %arg1: i32, %arg2: memref<128x8xf32, #tpu.memory_space<vmem>>, %arg3: memref<8x128xf32, #tpu.memory_space<vmem>>, %arg4: memref<1x128xf32, #tpu.memory_space<vmem>>, %arg5: memref<1x128xi32, #tpu.memory_space<vmem>>, %arg6: memref<1x2x256xf32, #tpu.memory_space<vmem>>) attributes {dimension_semantics = [#tpu.dimension_semantics<parallel>, #tpu.dimension_semantics<arbitrary>], iteration_bounds = array<i64: 1, 1>, scalar_prefetch = 0 : i64, scratch_operands = 0 : i64, tpu.core_type = #tpu.core_type<tc>, window_params = [{transform_indices = @transform_0, window_bounds = array<i64: 128, 8>}, {pipeline_mode = #tpu.pipeline_mode<synchronous>, transform_indices = @transform_1, window_bounds = array<i64: 8, 128>}, {pipeline_mode = #tpu.pipeline_mode<synchronous>, transform_indices = @transform_2, window_bounds = array<i64: 1, 128>}, {transform_indices = @transform_3, window_bounds = array<i64: 1, 128>}, {transform_indices = @transform_4, window_bounds = array<i64: 1, 2, 256>}]} {
    %c0_i32 = arith.constant 0 : i32
    %0 = arith.cmpi eq, %arg1, %c0_i32 : i32
    %1 = arith.extui %0 : i1 to i32
    %c0_i32_0 = arith.constant 0 : i32
    %2 = arith.cmpi ne, %1, %c0_i32_0 : i32
    scf.if %2 {
      %cst_22 = arith.constant 0.000000e+00 : f32
      %32 = vector.broadcast %cst_22 : f32 to vector<2x256xf32>
      %c0_23 = arith.constant 0 : index
      %c0_24 = arith.constant 0 : index
      %c0_25 = arith.constant 0 : index
      %33 = vector.load %arg6[%c0_23, %c0_24, %c0_25] : memref<1x2x256xf32, #tpu.memory_space<vmem>>, vector<1x2x256xf32>
      %34 = vector.shape_cast %33 : vector<1x2x256xf32> to vector<2x256xf32>
      %35 = vector.shape_cast %32 : vector<2x256xf32> to vector<1x2x256xf32>
      tpu.vector_store %arg6[%c0_23, %c0_24, %c0_25], %35 {strides = array<i32>} : memref<1x2x256xf32, #tpu.memory_space<vmem>>, vector<1x2x256xf32>,
    } else {
    }
    %c0 = arith.constant 0 : index
    %c0_1 = arith.constant 0 : index
    %3 = vector.load %arg2[%c0, %c0_1] : memref<128x8xf32, #tpu.memory_space<vmem>>, vector<128x8xf32>
    %c0_2 = arith.constant 0 : index
    %c0_3 = arith.constant 0 : index
    %4 = vector.load %arg3[%c0_2, %c0_3] : memref<8x128xf32, #tpu.memory_space<vmem>>, vector<8x128xf32>
    %c0_4 = arith.constant 0 : index
    %c0_5 = arith.constant 0 : index
    %5 = vector.load %arg4[%c0_4, %c0_5] : memref<1x128xf32, #tpu.memory_space<vmem>>, vector<1x128xf32>
    %cst = arith.constant dense<0.000000e+00> : vector<128x128xf32>
    %6 = tpu.matmul %3, %4, %cst {dimension_numbers = #tpu.dot_dimension_numbers<[1], [0], [0], [1], [0, 0, 1, 1], [], []>} : vector<128x8xf32>, vector<8x128xf32>, vector<128x128xf32> -> vector<128x128xf32>
    %7 = vector.broadcast %5 : vector<1x128xf32> to vector<128x128xf32>
    %8 = arith.addf %6, %7 : vector<128x128xf32>
    %cst_6 = arith.constant 0.000000e+00 : f32
    %9 = vector.broadcast %cst_6 : f32 to vector<128x128xf32>
    %10 = arith.maximumf %8, %9 : vector<128x128xf32>
    %c0_7 = arith.constant 0 : index
    %c0_8 = arith.constant 0 : index
    %11 = vector.load %arg5[%c0_7, %c0_8] : memref<1x128xi32, #tpu.memory_space<vmem>>, vector<1x128xi32>
    %12 = tpu.iota {dimensions = array<i32: 0>} : vector<2x128xi32>
    %13 = vector.broadcast %11 : vector<1x128xi32> to vector<2x128xi32>
    %14 = arith.cmpi eq, %12, %13 : vector<2x128xi32>
    %15 = arith.extui %14 : vector<2x128xi1> to vector<2x128xi32>
    %16 = arith.sitofp %15 : vector<2x128xi32> to vector<2x128xf32>
    %c0_9 = arith.constant 0 : index
    %c0_10 = arith.constant 0 : index
    %c0_11 = arith.constant 0 : index
    %17 = vector.load %arg6[%c0_9, %c0_10, %c0_11] : memref<1x2x256xf32, #tpu.memory_space<vmem>>, vector<1x2x128xf32>
    %18 = vector.shape_cast %17 : vector<1x2x128xf32> to vector<2x128xf32>
    %cst_12 = arith.constant dense<0.000000e+00> : vector<2x128xf32>
    %19 = tpu.matmul %16, %10, %cst_12 {dimension_numbers = #tpu.dot_dimension_numbers<[1], [0], [0], [1], [0, 0, 1, 1], [], []>} : vector<2x128xf32>, vector<128x128xf32>, vector<2x128xf32> -> vector<2x128xf32>
    %20 = arith.addf %18, %19 : vector<2x128xf32>
    %c0_13 = arith.constant 0 : index
    %c0_14 = arith.constant 0 : index
    %c0_15 = arith.constant 0 : index
    %21 = vector.load %arg6[%c0_13, %c0_14, %c0_15] : memref<1x2x256xf32, #tpu.memory_space<vmem>>, vector<1x2x128xf32>
    %22 = vector.shape_cast %21 : vector<1x2x128xf32> to vector<2x128xf32>
    %23 = vector.shape_cast %20 : vector<2x128xf32> to vector<1x2x128xf32>
    tpu.vector_store %arg6[%c0_13, %c0_14, %c0_15], %23 {strides = array<i32>} : memref<1x2x256xf32, #tpu.memory_space<vmem>>, vector<1x2x128xf32>,
    %c0_16 = arith.constant 0 : index
    %c0_17 = arith.constant 0 : index
    %c128 = arith.constant 128 : index
    %24 = vector.load %arg6[%c0_16, %c0_17, %c128] : memref<1x2x256xf32, #tpu.memory_space<vmem>>, vector<1x2x128xf32>
    %25 = vector.shape_cast %24 : vector<1x2x128xf32> to vector<2x128xf32>
    %26 = arith.mulf %10, %10 : vector<128x128xf32>
    %cst_18 = arith.constant dense<0.000000e+00> : vector<2x128xf32>
    %27 = tpu.matmul %16, %26, %cst_18 {dimension_numbers = #tpu.dot_dimension_numbers<[1], [0], [0], [1], [0, 0, 1, 1], [], []>} : vector<2x128xf32>, vector<128x128xf32>, vector<2x128xf32> -> vector<2x128xf32>
    %28 = arith.addf %25, %27 : vector<2x128xf32>
    %c0_19 = arith.constant 0 : index
    %c0_20 = arith.constant 0 : index
    %c128_21 = arith.constant 128 : index
    %29 = vector.load %arg6[%c0_19, %c0_20, %c128_21] : memref<1x2x256xf32, #tpu.memory_space<vmem>>, vector<1x2x128xf32>
    %30 = vector.shape_cast %29 : vector<1x2x128xf32> to vector<2x128xf32>
    %31 = vector.shape_cast %28 : vector<2x128xf32> to vector<1x2x128xf32>
    tpu.vector_store %arg6[%c0_19, %c0_20, %c128_21], %31 {strides = array<i32>} : memref<1x2x256xf32, #tpu.memory_space<vmem>>, vector<1x2x128xf32>,
    return
  }
  func.func @transform_0(%arg0: i32, %arg1: i32) -> (i32, i32) {
    %c1_i32 = arith.constant 1 : i32
    %0 = arith.muli %arg0, %c1_i32 : i32
    %1 = arith.addi %0, %arg1 : i32
    %c0_i32 = arith.constant 0 : i32
    %c0_i32_0 = arith.constant 0 : i32
    return %1, %c0_i32 : i32, i32
  }
  func.func @transform_1(%arg0: i32, %arg1: i32) -> (i32, i32) {
    %c0_i32 = arith.constant 0 : i32
    %c0_i32_0 = arith.constant 0 : i32
    %c0_i32_1 = arith.constant 0 : i32
    return %c0_i32, %c0_i32_0 : i32, i32
  }
  func.func @transform_2(%arg0: i32, %arg1: i32) -> (i32, i32) {
    %c0_i32 = arith.constant 0 : i32
    %c0_i32_0 = arith.constant 0 : i32
    %c0_i32_1 = arith.constant 0 : i32
    return %c0_i32, %c0_i32_0 : i32, i32
  }
  func.func @transform_3(%arg0: i32, %arg1: i32) -> (i32, i32) {
    %c1_i32 = arith.constant 1 : i32
    %0 = arith.muli %arg0, %c1_i32 : i32
    %1 = arith.addi %0, %arg1 : i32
    %c0_i32 = arith.constant 0 : i32
    %c0_i32_0 = arith.constant 0 : i32
    return %c0_i32, %1 : i32, i32
  }
  func.func @transform_4(%arg0: i32, %arg1: i32) -> (i32, i32, i32) {
    %c0_i32 = arith.constant 0 : i32
    %c0_i32_0 = arith.constant 0 : i32
    %c0_i32_1 = arith.constant 0 : i32
    return %arg0, %c0_i32, %c0_i32_0 : i32, i32, i32
  }
}

</mosaic_0001>

<llo_original>
// kernel: tpu_custom_call.1
$region0: #{tpu_custom_call.1}
  #allocation0 [shape = 'u32[]', space=smem, size = 0x4, offset = 0x4, fixed_abs, tag = 'smem constant byte address 0x4 - core index']
  #allocation1 [shape = 'u32[144,128]{1,0:T(1,128)}', space=vmem, size = 0x12000, scoped, tag = 'internal scratch']
  %s0 = inlined_call_operand.vmem [shape: f32[128,8], index: 0, kind: input, shape index: {}]
  %s1 = inlined_call_operand.vmem [shape: f32[8,128], index: 1, kind: input, shape index: {}]
  %s2 = inlined_call_operand.vmem [shape: f32[1,128], index: 2, kind: input, shape index: {}]
  %s3 = inlined_call_operand.vmem [shape: s32[1,128], index: 3, kind: input, shape index: {}]
  %s4 = inlined_call_operand.hbm [shape: f32[1,2,256], index: 4, kind: output, shape index: {}]
  %s5 = sld [smem:[#allocation0]]
  $region30: #{tpu_custom_call.1} parent=0
    _
  %s7 = ssub.s32 1, %s5
  %s8 = scalar_select 0, %s7, %s5
  $region1: #{tpu_custom_call.1} parent=0
    #allocation2 [shape = 'u8[2048]{0}', space=vmem, size = 0x800, scoped, tag = 'output window, operand 0, single buffered']
    #allocation3 [shape = 's32[1]{0}', space=sflag, size = 0x4, scoped, tag = 'scoped memory for tpu_custom_call.1']
    %9 = vsyncpa [#allocation3], 0
    // Predicated region
    $region2: #{tpu_custom_call.1} parent=1 // pred_check
      _
    $region3: #{tpu_custom_call.1} parent=1 // pred_check_branch
      %11 = sbr.rel (0) target = $region5
    $region4: #{tpu_custom_call.1} parent=1 // pred_region
      %s12 = sadd.s32 0, 0
      %s13 = smul.u32 16, %s12
      %p14 = scmp.lt.s32.totalorder %s13, 15
      %s15 = scalar_select %p14, %s13, 15
      %s16 = smul.addr %s15, 8
      %s17 = scalar_lea.vmem %s0, %s16
      %s18 = sadd.s32 0, 0
      %s19 = smul.u32 16, %s18
    $region5: #{tpu_custom_call.1} parent=1 // pred_fallthru
      _
    // Predicated region
    $region6: #{tpu_custom_call.1} parent=1 // pred_check
      _
    $region7: #{tpu_custom_call.1} parent=1 // pred_check_branch
      %21 = sbr.rel (0) target = $region9
    $region8: #{tpu_custom_call.1} parent=1 // pred_region
      _
    $region9: #{tpu_custom_call.1} parent=1 // pred_fallthru
      _
    // Predicated region
    $region10: #{tpu_custom_call.1} parent=1 // pred_check
      _
    $region11: #{tpu_custom_call.1} parent=1 // pred_check_branch
      %23 = sbr.rel (0) target = $region13
    $region12: #{tpu_custom_call.1} parent=1 // pred_region
      _
    $region13: #{tpu_custom_call.1} parent=1 // pred_fallthru
      _
    // Predicated region
    $region14: #{tpu_custom_call.1} parent=1 // pred_check
      _
    $region15: #{tpu_custom_call.1} parent=1 // pred_check_branch
      %25 = sbr.rel (0) target = $region17
    $region16: #{tpu_custom_call.1} parent=1 // pred_region
      %s26 = sadd.s32 0, 0
      %p27 = scmp.lt.s32.totalorder %s26, 0
      %s28 = scalar_select %p27, %s26, 0
      %s29 = scalar_lea.vmem %s3, %s28
      %s30 = sadd.s32 0, 0
    $region17: #{tpu_custom_call.1} parent=1 // pred_fallthru
      _
    %s31 = sadd.s32 0, 0
    %s32 = smul.u32 16, %s31
    %p33 = scmp.lt.s32.totalorder %s32, 15
    %s34 = scalar_select %p33, %s32, 15
    %s35 = smul.addr %s34, 8
    %s36 = scalar_lea.vmem %s0, %s35
    %s37 = sadd.s32 0, 0
    %p38 = scmp.lt.s32.totalorder %s37, 0
    %s39 = scalar_select %p38, %s37, 0
    %s40 = scalar_lea.vmem %s3, %s39
    %s41 = sadd.s32 0, 0
    %s42 = smul.u32 16, %s41
    %p43 = scmp.lt.s32.totalorder %s42, 15
    %s44 = scalar_select %p43, %s42, 15
    %s45 = smul.addr %s44, 8
    %s46 = scalar_lea.vmem %s0, %s45
    %s47 = sadd.s32 0, 0
    %s48 = smul.u32 16, %s47
    %s49 = sadd.s32 0, 0
    %p50 = scmp.lt.s32.totalorder %s49, 0
    %s51 = scalar_select %p50, %s49, 0
    %s52 = scalar_lea.vmem %s3, %s51
    %s53 = sadd.s32 0, 0
    %p54 = scmp.eq.s32.totalorder 0, 0
    // Predicated region
    $region18: #{tpu_custom_call.1} parent=1 // pred_check
      %p55 = pneg %p54
    $region19: #{tpu_custom_call.1} parent=1 // pred_check_branch
      %57 = sbr.rel (%p55) target = $region21
    $region20: #{tpu_custom_call.1} parent=1 // pred_region
      %58 = vst [vmem:[#allocation2] sm:$0xf] 0.0
    $region21: #{tpu_custom_call.1} parent=1 // pred_fallthru
      _
    %v59 = vld [vmem:[%s46] sm:$0xff]
    %v60 = vld [vmem:[%s46 + $0x8] sm:$0xff]
    %v61 = vld [vmem:[%s46 + $0x10] sm:$0xff]
    %v62 = vld [vmem:[%s46 + $0x18] sm:$0xff]
    %v63 = vld [vmem:[%s46 + $0x20] sm:$0xff]
    %v64 = vld [vmem:[%s46 + $0x28] sm:$0xff]
    %v65 = vld [vmem:[%s46 + $0x30] sm:$0xff]
    %v66 = vld [vmem:[%s46 + $0x38] sm:$0xff]
    %v67 = vld [vmem:[%s46 + $0x40] sm:$0xff]
    %v68 = vld [vmem:[%s46 + $0x48] sm:$0xff]
    %v69 = vld [vmem:[%s46 + $0x50] sm:$0xff]
    %v70 = vld [vmem:[%s46 + $0x58] sm:$0xff]
    %v71 = vld [vmem:[%s46 + $0x60] sm:$0xff]
    %v72 = vld [vmem:[%s46 + $0x68] sm:$0xff]
    %v73 = vld [vmem:[%s46 + $0x70] sm:$0xff]
    %v74 = vld [vmem:[%s46 + $0x78] sm:$0xff]
    %v75 = vld [vmem:[%s1] sm:$0xff]
    %v76 = vld [vmem:[%s2] sm:$0x1]
    %v78 = vlaneseq
    %v79 = vshrl.u32 %v78, 7
    %v80 = vsub.s32 0, %v79
    %v81 = vrot.slane %v76, %v80
    %vm83 = vcmask 64512
    %v85 = vsel %vm83, %v59, 0
    %v88 = vsel %vm83, %v60, 0
    %v91 = vsel %vm83, %v61, 0
    %v94 = vsel %vm83, %v62, 0
    %v97 = vsel %vm83, %v63, 0
    %v100 = vsel %vm83, %v64, 0
    %v103 = vsel %vm83, %v65, 0
    %v106 = vsel %vm83, %v66, 0
    %v109 = vsel %vm83, %v67, 0
    %v112 = vsel %vm83, %v68, 0
    %v115 = vsel %vm83, %v69, 0
    %v118 = vsel %vm83, %v70, 0
    %v121 = vsel %vm83, %v71, 0
    %v124 = vsel %vm83, %v72, 0
    %v127 = vsel %vm83, %v73, 0
    %v130 = vsel %vm83, %v74, 0
    %132 = vmatprep.subr.mxu0 0.0
    %133 = vmatpush1.msra.mxu0 0.0
    %134 = vmatprep.subr.mxu0 0.0
    %135 = vmatpush1.msra.mxu0 0.0
    %136 = vmatprep.subr.mxu0 0.0
    %137 = vmatpush1.msra.mxu0 0.0
    %138 = vmatprep.subr.mxu0 0.0
    %139 = vmatpush1.msra.mxu0 0.0
    %140 = vmatprep.subr.mxu0 0.0
    %141 = vmatpush1.msra.mxu0 0.0
    %142 = vmatprep.subr.mxu0 0.0
    %143 = vmatpush1.msra.mxu0 0.0
    %144 = vmatprep.subr.mxu0 0.0
    %145 = vmatpush1.msra.mxu0 0.0
    %146 = vmatprep.subr.mxu0 0.0
    %147 = vmatpush1.msra.mxu0 0.0
    %148 = vmatprep.subr.mxu0 0.0
    %149 = vmatpush1.msra.mxu0 0.0
    %150 = vmatprep.subr.mxu0 0.0
    %151 = vmatpush1.msra.mxu0 0.0
    %152 = vmatprep.subr.mxu0 0.0
    %153 = vmatpush1.msra.mxu0 0.0
    %154 = vmatprep.subr.mxu0 0.0
    %155 = vmatpush1.msra.mxu0 0.0
    %156 = vmatprep.subr.mxu0 0.0
    %157 = vmatpush1.msra.mxu0 0.0
    %158 = vmatprep.subr.mxu0 0.0
    %159 = vmatpush1.msra.mxu0 0.0
    %160 = vmatprep.subr.mxu0 0.0
    %161 = vmatpush1.msra.mxu0 0.0
    %162 = vmatprep.subr.mxu0 0.0
    %163 = vmatpush1.msra.mxu0 %v75
    %164 = vmatprep.subr.mxu0 0.0
    %165 = vmatpush2.msra.mxu0 0.0
    %166 = vmatprep.subr.mxu0 0.0
    %167 = vmatpush2.msra.mxu0 0.0
    %168 = vmatprep.subr.mxu0 0.0
    %169 = vmatpush2.msra.mxu0 0.0
    %170 = vmatprep.subr.mxu0 0.0
    %171 = vmatpush2.msra.mxu0 0.0
    %172 = vmatprep.subr.mxu0 0.0
    %173 = vmatpush2.msra.mxu0 0.0
    %174 = vmatprep.subr.mxu0 0.0
    %175 = vmatpush2.msra.mxu0 0.0
    %176 = vmatprep.subr.mxu0 0.0
    %177 = vmatpush2.msra.mxu0 0.0
    %178 = vmatprep.subr.mxu0 0.0
    %179 = vmatpush2.msra.mxu0 0.0
    %180 = vmatprep.subr.mxu0 0.0
    %181 = vmatpush2.msra.mxu0 0.0
    %182 = vmatprep.subr.mxu0 0.0
    %183 = vmatpush2.msra.mxu0 0.0
    %184 = vmatprep.subr.mxu0 0.0
    %185 = vmatpush2.msra.mxu0 0.0
    %186 = vmatprep.subr.mxu0 0.0
    %187 = vmatpush2.msra.mxu0 0.0
    %188 = vmatprep.subr.mxu0 0.0
    %189 = vmatpush2.msra.mxu0 0.0
    %190 = vmatprep.subr.mxu0 0.0
    %191 = vmatpush2.msra.mxu0 0.0
    %192 = vmatprep.subr.mxu0 0.0
    %193 = vmatpush2.msra.mxu0 0.0
    %194 = vmatprep.subr.mxu0 0.0
    %195 = vmatpush2.msra.mxu0 0.0
    %196 = vmatprep.mubr.f32.mxu0 0.0
    %197 = vmatmul.mubr.f32.gmra.mxu0 %v85
    %v198 = vpop.f32.mrf.mxu0
    %v199 = vadd.f32 %v81, %v198
    %v200 = vpop.f32.mrf.mxu0
    %201 = vmatprep.mubr.f32.mxu0 0.0
    %202 = vmatmul.mubr.f32.gmra.mxu0 %v88
    %v203 = vpop.f32.mrf.mxu0
    %v204 = vadd.f32 %v81, %v203
    %v205 = vpop.f32.mrf.mxu0
    %206 = vmatprep.mubr.f32.mxu0 0.0
    %207 = vmatmul.mubr.f32.gmra.mxu0 %v91
    %v208 = vpop.f32.mrf.mxu0
    %v209 = vadd.f32 %v81, %v208
    %v210 = vpop.f32.mrf.mxu0
    %211 = vmatprep.mubr.f32.mxu0 0.0
    %212 = vmatmul.mubr.f32.gmra.mxu0 %v94
    %v213 = vpop.f32.mrf.mxu0
    %v214 = vadd.f32 %v81, %v213
    %v215 = vpop.f32.mrf.mxu0
    %216 = vmatprep.mubr.f32.mxu0 0.0
    %217 = vmatmul.mubr.f32.gmra.mxu0 %v97
    %v218 = vpop.f32.mrf.mxu0
    %v219 = vadd.f32 %v81, %v218
    %v220 = vpop.f32.mrf.mxu0
    %221 = vmatprep.mubr.f32.mxu0 0.0
    %222 = vmatmul.mubr.f32.gmra.mxu0 %v100
    %v223 = vpop.f32.mrf.mxu0
    %v224 = vadd.f32 %v81, %v223
    %v225 = vpop.f32.mrf.mxu0
    %226 = vmatprep.mubr.f32.mxu0 0.0
    %227 = vmatmul.mubr.f32.gmra.mxu0 %v103
    %v228 = vpop.f32.mrf.mxu0
    %v229 = vadd.f32 %v81, %v228
    %v230 = vpop.f32.mrf.mxu0
    %231 = vmatprep.mubr.f32.mxu0 0.0
    %232 = vmatmul.mubr.f32.gmra.mxu0 %v106
    %v233 = vpop.f32.mrf.mxu0
    %v234 = vadd.f32 %v81, %v233
    %v235 = vpop.f32.mrf.mxu0
    %236 = vmatprep.mubr.f32.mxu0 0.0
    %237 = vmatmul.mubr.f32.gmra.mxu0 %v109
    %v238 = vpop.f32.mrf.mxu0
    %v239 = vadd.f32 %v81, %v238
    %v240 = vpop.f32.mrf.mxu0
    %241 = vmatprep.mubr.f32.mxu0 0.0
    %242 = vmatmul.mubr.f32.gmra.mxu0 %v112
    %v243 = vpop.f32.mrf.mxu0
    %v244 = vadd.f32 %v81, %v243
    %v245 = vpop.f32.mrf.mxu0
    %246 = vmatprep.mubr.f32.mxu0 0.0
    %247 = vmatmul.mubr.f32.gmra.mxu0 %v115
    %v248 = vpop.f32.mrf.mxu0
    %v249 = vadd.f32 %v81, %v248
    %v250 = vpop.f32.mrf.mxu0
    %251 = vmatprep.mubr.f32.mxu0 0.0
    %252 = vmatmul.mubr.f32.gmra.mxu0 %v118
    %v253 = vpop.f32.mrf.mxu0
    %v254 = vadd.f32 %v81, %v253
    %v255 = vpop.f32.mrf.mxu0
    %256 = vmatprep.mubr.f32.mxu0 0.0
    %257 = vmatmul.mubr.f32.gmra.mxu0 %v121
    %v258 = vpop.f32.mrf.mxu0
    %v259 = vadd.f32 %v81, %v258
    %v260 = vpop.f32.mrf.mxu0
    %261 = vmatprep.mubr.f32.mxu0 0.0
    %262 = vmatmul.mubr.f32.gmra.mxu0 %v124
    %v263 = vpop.f32.mrf.mxu0
    %v264 = vadd.f32 %v81, %v263
    %v265 = vpop.f32.mrf.mxu0
    %266 = vmatprep.mubr.f32.mxu0 0.0
    %267 = vmatmul.mubr.f32.gmra.mxu0 %v127
    %v268 = vpop.f32.mrf.mxu0
    %v269 = vadd.f32 %v81, %v268
    %v270 = vpop.f32.mrf.mxu0
    %271 = vmatprep.mubr.f32.mxu0 0.0
    %272 = vmatmul.mubr.f32.gmra.mxu0 %v130
    %v273 = vpop.f32.mrf.mxu0
    %v274 = vadd.f32 %v81, %v273
    %v275 = vpop.f32.mrf.mxu0
    %276 = vdwg.mxu0
    %v277 = vmax.f32 %v199, 0.0
    %v278 = vmax.f32 %v204, 0.0
    %v279 = vmax.f32 %v209, 0.0
    %v280 = vmax.f32 %v214, 0.0
    %v281 = vmax.f32 %v219, 0.0
    %v282 = vmax.f32 %v224, 0.0
    %v283 = vmax.f32 %v229, 0.0
    %v284 = vmax.f32 %v234, 0.0
    %v285 = vmax.f32 %v239, 0.0
    %v286 = vmax.f32 %v244, 0.0
    %v287 = vmax.f32 %v249, 0.0
    %v288 = vmax.f32 %v254, 0.0
    %v289 = vmax.f32 %v259, 0.0
    %v290 = vmax.f32 %v264, 0.0
    %v291 = vmax.f32 %v269, 0.0
    %v292 = vmax.f32 %v274, 0.0
    %v293 = vld [vmem:[%s52] sm:$0x1]
    %v294 = vlaneseq
    %v295 = vshrl.u32 %v294, 7
    %v296 = vlaneseq
    %v297 = vshrl.u32 %v296, 7
    %v298 = vsub.s32 0, %v297
    %v299 = vrot.slane %v293, %v298
    %vm300 = vcmp.eq.s32.totalorder %v295, %v299
    %v301 = vsel %vm300, 1, 0
    %v302 = vcvt.s32.f32 %v301
    %v303 = vld [vmem:[#allocation2] sm:$0x3]
    %304 = vmatprep.subr.mxu0 0.0
    %305 = vmatpush1.msra.mxu0 %v292
    %306 = vmatprep.subr.mxu0 0.0
    %307 = vmatpush1.msra.mxu0 %v291
    %308 = vmatprep.subr.mxu0 0.0
    %309 = vmatpush1.msra.mxu0 %v290
    %310 = vmatprep.subr.mxu0 0.0
    %311 = vmatpush1.msra.mxu0 %v289
    %312 = vmatprep.subr.mxu0 0.0
    %313 = vmatpush1.msra.mxu0 %v288
    %314 = vmatprep.subr.mxu0 0.0
    %315 = vmatpush1.msra.mxu0 %v287
    %316 = vmatprep.subr.mxu0 0.0
    %317 = vmatpush1.msra.mxu0 %v286
    %318 = vmatprep.subr.mxu0 0.0
    %319 = vmatpush1.msra.mxu0 %v285
    %320 = vmatprep.subr.mxu0 0.0
    %321 = vmatpush1.msra.mxu0 %v284
    %322 = vmatprep.subr.mxu0 0.0
    %323 = vmatpush1.msra.mxu0 %v283
    %324 = vmatprep.subr.mxu0 0.0
    %325 = vmatpush1.msra.mxu0 %v282
    %326 = vmatprep.subr.mxu0 0.0
    %327 = vmatpush1.msra.mxu0 %v281
    %328 = vmatprep.subr.mxu0 0.0
    %329 = vmatpush1.msra.mxu0 %v280
    %330 = vmatprep.subr.mxu0 0.0
    %331 = vmatpush1.msra.mxu0 %v279
    %332 = vmatprep.subr.mxu0 0.0
    %333 = vmatpush1.msra.mxu0 %v278
    %334 = vmatprep.subr.mxu0 0.0
    %335 = vmatpush1.msra.mxu0 %v277
    %336 = vmatprep.subr.mxu0 0.0
    %337 = vmatpush2.msra.mxu0 0.0
    %338 = vmatprep.subr.mxu0 0.0
    %339 = vmatpush2.msra.mxu0 0.0
    %340 = vmatprep.subr.mxu0 0.0
    %341 = vmatpush2.msra.mxu0 0.0
    %342 = vmatprep.subr.mxu0 0.0
    %343 = vmatpush2.msra.mxu0 0.0
    %344 = vmatprep.subr.mxu0 0.0
    %345 = vmatpush2.msra.mxu0 0.0
    %346 = vmatprep.subr.mxu0 0.0
    %347 = vmatpush2.msra.mxu0 0.0
    %348 = vmatprep.subr.mxu0 0.0
    %349 = vmatpush2.msra.mxu0 0.0
    %350 = vmatprep.subr.mxu0 0.0
    %351 = vmatpush2.msra.mxu0 0.0
    %352 = vmatprep.subr.mxu0 0.0
    %353 = vmatpush2.msra.mxu0 0.0
    %354 = vmatprep.subr.mxu0 0.0
    %355 = vmatpush2.msra.mxu0 0.0
    %356 = vmatprep.subr.mxu0 0.0
    %357 = vmatpush2.msra.mxu0 0.0
    %358 = vmatprep.subr.mxu0 0.0
    %359 = vmatpush2.msra.mxu0 0.0
    %360 = vmatprep.subr.mxu0 0.0
    %361 = vmatpush2.msra.mxu0 0.0
    %362 = vmatprep.subr.mxu0 0.0
    %363 = vmatpush2.msra.mxu0 0.0
    %364 = vmatprep.subr.mxu0 0.0
    %365 = vmatpush2.msra.mxu0 0.0
    %366 = vmatprep.subr.mxu0 0.0
    %367 = vmatpush2.msra.mxu0 0.0
    %368 = vmatprep.mubr.f32.mxu0 0.0
    %369 = vmatmul.mubr.f32.gmra.mxu0 %v302
    %v370 = vpop.f32.mrf.mxu0
    %v371 = vadd.f32 0.0, %v370
    %v372 = vpop.f32.mrf.mxu0
    %373 = vdwg.mxu0
    %v374 = vadd.f32 %v303, %v371
    %375 = vst [vmem:[#allocation2] sm:$0x3] %v374
    %v376 = vld [vmem:[#allocation2 + $0x2] sm:$0x3]
    %v377 = vmul.f32 %v277, %v277
    %v378 = vmul.f32 %v278, %v278
    %v379 = vmul.f32 %v279, %v279
    %v380 = vmul.f32 %v280, %v280
    %v381 = vmul.f32 %v281, %v281
    %v382 = vmul.f32 %v282, %v282
    %v383 = vmul.f32 %v283, %v283
    %v384 = vmul.f32 %v284, %v284
    %v385 = vmul.f32 %v285, %v285
    %v386 = vmul.f32 %v286, %v286
    %v387 = vmul.f32 %v287, %v287
    %v388 = vmul.f32 %v288, %v288
    %v389 = vmul.f32 %v289, %v289
    %v390 = vmul.f32 %v290, %v290
    %v391 = vmul.f32 %v291, %v291
    %v392 = vmul.f32 %v292, %v292
    %393 = vmatprep.subr.mxu0 0.0
    %394 = vmatpush1.msra.mxu0 %v392
    %395 = vmatprep.subr.mxu0 0.0
    %396 = vmatpush1.msra.mxu0 %v391
    %397 = vmatprep.subr.mxu0 0.0
    %398 = vmatpush1.msra.mxu0 %v390
    %399 = vmatprep.subr.mxu0 0.0
    %400 = vmatpush1.msra.mxu0 %v389
    %401 = vmatprep.subr.mxu0 0.0
    %402 = vmatpush1.msra.mxu0 %v388
    %403 = vmatprep.subr.mxu0 0.0
    %404 = vmatpush1.msra.mxu0 %v387
    %405 = vmatprep.subr.mxu0 0.0
    %406 = vmatpush1.msra.mxu0 %v386
    %407 = vmatprep.subr.mxu0 0.0
    %408 = vmatpush1.msra.mxu0 %v385
    %409 = vmatprep.subr.mxu0 0.0
    %410 = vmatpush1.msra.mxu0 %v384
    %411 = vmatprep.subr.mxu0 0.0
    %412 = vmatpush1.msra.mxu0 %v383
    %413 = vmatprep.subr.mxu0 0.0
    %414 = vmatpush1.msra.mxu0 %v382
    %415 = vmatprep.subr.mxu0 0.0
    %416 = vmatpush1.msra.mxu0 %v381
    %417 = vmatprep.subr.mxu0 0.0
    %418 = vmatpush1.msra.mxu0 %v380
    %419 = vmatprep.subr.mxu0 0.0
    %420 = vmatpush1.msra.mxu0 %v379
    %421 = vmatprep.subr.mxu0 0.0
    %422 = vmatpush1.msra.mxu0 %v378
    %423 = vmatprep.subr.mxu0 0.0
    %424 = vmatpush1.msra.mxu0 %v377
    %425 = vmatprep.subr.mxu0 0.0
    %426 = vmatpush2.msra.mxu0 0.0
    %427 = vmatprep.subr.mxu0 0.0
    %428 = vmatpush2.msra.mxu0 0.0
    %429 = vmatprep.subr.mxu0 0.0
    %430 = vmatpush2.msra.mxu0 0.0
    %431 = vmatprep.subr.mxu0 0.0
    %432 = vmatpush2.msra.mxu0 0.0
    %433 = vmatprep.subr.mxu0 0.0
    %434 = vmatpush2.msra.mxu0 0.0
    %435 = vmatprep.subr.mxu0 0.0
    %436 = vmatpush2.msra.mxu0 0.0
    %437 = vmatprep.subr.mxu0 0.0
    %438 = vmatpush2.msra.mxu0 0.0
    %439 = vmatprep.subr.mxu0 0.0
    %440 = vmatpush2.msra.mxu0 0.0
    %441 = vmatprep.subr.mxu0 0.0
    %442 = vmatpush2.msra.mxu0 0.0
    %443 = vmatprep.subr.mxu0 0.0
    %444 = vmatpush2.msra.mxu0 0.0
    %445 = vmatprep.subr.mxu0 0.0
    %446 = vmatpush2.msra.mxu0 0.0
    %447 = vmatprep.subr.mxu0 0.0
    %448 = vmatpush2.msra.mxu0 0.0
    %449 = vmatprep.subr.mxu0 0.0
    %450 = vmatpush2.msra.mxu0 0.0
    %451 = vmatprep.subr.mxu0 0.0
    %452 = vmatpush2.msra.mxu0 0.0
    %453 = vmatprep.subr.mxu0 0.0
    %454 = vmatpush2.msra.mxu0 0.0
    %455 = vmatprep.subr.mxu0 0.0
    %456 = vmatpush2.msra.mxu0 0.0
    %457 = vmatprep.mubr.f32.mxu0 0.0
    %458 = vmatmul.mubr.f32.gmra.mxu0 %v302
    %v459 = vpop.f32.mrf.mxu0
    %v460 = vadd.f32 0.0, %v459
    %v461 = vpop.f32.mrf.mxu0
    %462 = vdwg.mxu0
    %v463 = vadd.f32 %v376, %v460
    %464 = vst [vmem:[#allocation2 + $0x2] sm:$0x3] %v463
    // Predicated region
    $region22: #{tpu_custom_call.1} parent=1 // pred_check
      _
    $region23: #{tpu_custom_call.1} parent=1 // pred_check_branch
      %466 = sbr.rel (0) target = $region25
    $region24: #{tpu_custom_call.1} parent=1 // pred_region
      %s468 = ssub.s32 64, 64
      %469 = vsyncadd [#allocation3], %s468
      %s471 = sshll.u32 [#allocation2], 4
      %s472 = int_to_ptr.vmem [resolvable:$true] %s471
      %474 = dma.vmem_to_hbm [thread:$0]  %s472, 64, %s4, [#allocation3]
    $region25: #{tpu_custom_call.1} parent=1 // pred_fallthru
      _
    // Predicated region
    $region26: #{tpu_custom_call.1} parent=1 // pred_check
      _
    $region27: #{tpu_custom_call.1} parent=1 // pred_check_branch
      %476 = sbr.rel (0) target = $region29
    $region28: #{tpu_custom_call.1} parent=1 // pred_region
      %477 = dma.done [#allocation3], 64
    $region29: #{tpu_custom_call.1} parent=1 // pred_fallthru
      _
    %478 = vsyncpa [#allocation3], 1

</llo_original>
